<compile_context>
chip_gen: v5e
topology: v5e:2x2
jax: 0.10.0
libtpu: 0.0.40
codegen_flags: <defaults>
</compile_context>

<pallas_src>
import jax
import jax.numpy as jnp
from jax.experimental import pallas as pl
from jax.experimental.pallas import tpu as pltpu


def _upsample_kernel(x_ref, w_ref, b_ref, o_ref):
    # x_ref: (Cin, TP)    -- pixels on the 128-lane axis
    # w_ref: (TKKC, Cin)  -- rows ordered (co, kh, kw)
    # b_ref: (TKKC, 1)    -- f32 bias column (broadcast over pixels)
    # o_ref: (TKKC, TP)
    acc = jnp.dot(w_ref[...], x_ref[...], preferred_element_type=jnp.float32)
    o_ref[...] = (acc + b_ref[...]).astype(o_ref.dtype)


def _choose_tile(dim, target, mult):
    """Largest multiple of `mult` that divides `dim` and is <= target.
    Falls back to the full dim when `dim` is not a multiple of `mult`
    (full-extent blocks are always legal)."""
    if dim % mult != 0:
        return dim
    t = max((min(target, dim) // mult) * mult, mult)
    while dim % t != 0:
        t -= mult
    return t


def upsample_forward(x_nchw, weight, bias, kernel_size, stride, *,
                     compute_dtype=jnp.bfloat16,
                     tile_pixels=1024, tile_kkc=512):
    """ConvTranspose2d(input_dim, output_dim, kernel_size, stride) forward.

    x_nchw : [N, Cin, H, W]
    weight : [Cin, Cout, K, K]   (PyTorch ConvTranspose2d weight layout)
    bias   : [Cout]
    Requires kernel_size == stride (non-overlapping upsample).
    Returns [N, Cout, H*K, W*K] in the input dtype.
    """
    assert kernel_size == stride, "kernel implemented for kernel_size == stride"
    # TODO(synk): general ConvTranspose2d (stride != kernel_size, padding,
    # output_padding, dilation) needs overlapping-window accumulation and is
    # not implemented here.
    N, Cin, H, W = x_nchw.shape
    Cin_w, Cout, K, K2 = weight.shape
    assert Cin_w == Cin and K == kernel_size and K2 == kernel_size

    HW = H * W
    KKC = Cout * K * K
    out_dtype = x_nchw.dtype

    # ---- free views / tiny-tensor prep (no full-activation HBM pass) ----
    # [N, Cin, H, W] -> [N, Cin, H*W] is a row-major view (no data movement).
    x3 = x_nchw.reshape(N, Cin, HW).astype(compute_dtype)
    # w2[co*K*K + kh*K + kw, ci] = weight[ci, co, kh, kw]
    w2 = jnp.transpose(weight, (1, 2, 3, 0)).reshape(KKC, Cin).astype(compute_dtype)
    # each output pixel receives exactly one (kh, kw) contribution -> bias once
    b2 = jnp.repeat(bias.astype(jnp.float32), K * K).reshape(KKC, 1)

    # ---- tiling: pixels lane-dense (mult of 128), KKC on sublanes (mult 8) ----
    tp = _choose_tile(HW, tile_pixels, 128)    # divides HW -> never pad
    tk = _choose_tile(KKC, tile_kkc, 8)        # divides KKC (or full)
    grid = (N, KKC // tk, HW // tp)

    ib = jnp.dtype(compute_dtype).itemsize
    ob = jnp.dtype(out_dtype).itemsize
    # double-buffered VMEM footprint of one grid step (v7x has 64 MiB only)
    block_bytes = 2 * (Cin * tp * ib + tk * Cin * ib + tk * 4 + tk * tp * ob)
    cp_kwargs = {"dimension_semantics": ("parallel", "parallel", "parallel")}
    if block_bytes > 16 * 1024 * 1024:
        cp_kwargs["vmem_limit_bytes"] = int(min(2 * block_bytes, 64 * 1024 * 1024))

    cost = pl.CostEstimate(
        flops=2 * N * HW * Cin * KKC,
        transcendentals=0,
        bytes_accessed=(x3.size * ib + w2.size * ib + b2.size * 4
                        + N * KKC * HW * ob),
    )

    grid_spec = pltpu.PrefetchScalarGridSpec(
        num_scalar_prefetch=0,
        grid=grid,
        in_specs=[
            pl.BlockSpec((None, Cin, tp), lambda n, j, p: (n, 0, p)),   # x
            pl.BlockSpec((tk, Cin), lambda n, j, p: (j, 0)),            # weights
            pl.BlockSpec((tk, 1), lambda n, j, p: (j, 0)),              # bias
        ],
        out_specs=pl.BlockSpec((None, tk, tp), lambda n, j, p: (n, j, p)),
    )

    y = pl.pallas_call(
        _upsample_kernel,
        out_shape=jax.ShapeDtypeStruct((N, KKC, HW), out_dtype),
        grid_spec=grid_spec,
        compiler_params=pltpu.CompilerParams(**cp_kwargs),
        cost_estimate=cost,
    )(x3, w2, b2)

    # ---- single post-kernel layout pass: (co,kh,kw) x (h,w) -> NCHW ----
    y = y.reshape(N, Cout, K, K, H, W)          # free view
    y = jnp.transpose(y, (0, 1, 4, 2, 5, 3))    # the one remaining HBM pass
    return y.reshape(N, Cout, H * K, W * K)     # free view


def _reference_conv_transpose(x, weight, bias, kernel_size, stride):
    """Independent pure-JAX reference matching PyTorch ConvTranspose2d."""
    N, Cin, H, W = x.shape
    _, Cout, K, _ = weight.shape
    OH = (H - 1) * stride + K
    OW = (W - 1) * stride + K
    out = jnp.zeros((N, Cout, OH, OW), jnp.float32)
    for kh in range(K):
        for kw in range(K):
            contrib = jnp.einsum("nihw,io->nohw", x, weight[:, :, kh, kw],
                                 precision=jax.lax.Precision.HIGHEST)
            out = out.at[
                :, :,
                kh: kh + (H - 1) * stride + 1: stride,
                kw: kw + (W - 1) * stride + 1: stride,
            ].add(contrib)
    return out + bias[None, :, None, None]


if __name__ == "__main__":
    # UpSample(input_dim=4, output_dim=8, kernel_size=2, stride=2)
    input_dim, output_dim, kernel_size, stride = 4, 8, 2, 2
    N, H, W = 2, 16, 16

    key = jax.random.PRNGKey(0)
    kx, kw, kb = jax.random.split(key, 3)

    x = jax.random.normal(kx, (N, input_dim, H, W), dtype=jnp.float32)
    fan = input_dim * kernel_size * kernel_size
    bound = 1.0 / (fan ** 0.5)
    weight = jax.random.uniform(
        kw, (input_dim, output_dim, kernel_size, kernel_size),
        dtype=jnp.float32, minval=-bound, maxval=bound)
    bias = jax.random.uniform(
        kb, (output_dim,), dtype=jnp.float32, minval=-bound, maxval=bound)

    out = upsample_forward(x, weight, bias, kernel_size, stride)
    out = jax.block_until_ready(out)
    assert out.shape == (N, output_dim, H * stride, W * stride), out.shape

    # Tight check: reference computed on the same bf16-rounded inputs the
    # kernel consumed (isolates kernel math from the deliberate bf16 cast).
    x_q = x.astype(jnp.bfloat16).astype(jnp.float32)
    w_q = weight.astype(jnp.bfloat16).astype(jnp.float32)
    ref_q = _reference_conv_transpose(x_q, w_q, bias, kernel_size, stride)
    assert jnp.allclose(out, ref_q, atol=1e-4, rtol=1e-4), \
        "mismatch vs bf16-input reference"

    # Loose check: full-f32 reference (difference = bf16 input quantization).
    ref = _reference_conv_transpose(x, weight, bias, kernel_size, stride)
    assert jnp.allclose(out, ref, atol=5e-2, rtol=5e-2), \
        "mismatch vs f32 reference"

    print("KERNEL_OK")
</pallas_src>

<mosaic_0001>
module attributes {stable_mosaic.version = 11 : i64} {
  func.func @_upsample_kernel(%arg0: i32, %arg1: i32, %arg2: i32, %arg3: memref<1x4x256xbf16, #tpu.memory_space<vmem>>, %arg4: memref<32x4xbf16, #tpu.memory_space<vmem>>, %arg5: memref<32x1xf32, #tpu.memory_space<vmem>>, %arg6: memref<1x32x256xf32, #tpu.memory_space<vmem>>) attributes {dimension_semantics = [#tpu.dimension_semantics<parallel>, #tpu.dimension_semantics<parallel>, #tpu.dimension_semantics<parallel>], iteration_bounds = array<i64: 2, 1, 1>, scalar_prefetch = 0 : i64, scratch_operands = 0 : i64, tpu.core_type = #tpu.core_type<tc>, window_params = [{transform_indices = @transform_0, window_bounds = array<i64: 1, 4, 256>}, {transform_indices = @transform_1, window_bounds = array<i64: 32, 4>}, {transform_indices = @transform_2, window_bounds = array<i64: 32, 1>}, {transform_indices = @transform_3, window_bounds = array<i64: 1, 32, 256>}]} {
    %c0 = arith.constant 0 : index
    %c0_0 = arith.constant 0 : index
    %0 = vector.load %arg4[%c0, %c0_0] : memref<32x4xbf16, #tpu.memory_space<vmem>>, vector<32x4xbf16>
    %c0_1 = arith.constant 0 : index
    %c0_2 = arith.constant 0 : index
    %c0_3 = arith.constant 0 : index
    %1 = vector.load %arg3[%c0_1, %c0_2, %c0_3] : memref<1x4x256xbf16, #tpu.memory_space<vmem>>, vector<1x4x256xbf16>
    %2 = vector.shape_cast %1 : vector<1x4x256xbf16> to vector<4x256xbf16>
    %cst = arith.constant dense<0.000000e+00> : vector<32x256xf32>
    %3 = tpu.matmul %0, %2, %cst {dimension_numbers = #tpu.dot_dimension_numbers<[1], [0], [0], [1], [0, 0, 1, 1], [], []>} : vector<32x4xbf16>, vector<4x256xbf16>, vector<32x256xf32> -> vector<32x256xf32>
    %c0_4 = arith.constant 0 : index
    %c0_5 = arith.constant 0 : index
    %4 = vector.load %arg5[%c0_4, %c0_5] : memref<32x1xf32, #tpu.memory_space<vmem>>, vector<32x1xf32>
    %5 = vector.broadcast %4 : vector<32x1xf32> to vector<32x256xf32>
    %6 = arith.addf %3, %5 : vector<32x256xf32>
    %c0_6 = arith.constant 0 : index
    %c0_7 = arith.constant 0 : index
    %c0_8 = arith.constant 0 : index
    %7 = vector.load %arg6[%c0_6, %c0_7, %c0_8] : memref<1x32x256xf32, #tpu.memory_space<vmem>>, vector<1x32x256xf32>
    %8 = vector.shape_cast %7 : vector<1x32x256xf32> to vector<32x256xf32>
    %9 = vector.shape_cast %6 : vector<32x256xf32> to vector<1x32x256xf32>
    tpu.vector_store %arg6[%c0_6, %c0_7, %c0_8], %9 {strides = array<i32>} : memref<1x32x256xf32, #tpu.memory_space<vmem>>, vector<1x32x256xf32>,
    return
  }
  func.func @transform_0(%arg0: i32, %arg1: i32, %arg2: i32) -> (i32, i32, i32) {
    %c0_i32 = arith.constant 0 : i32
    %c0_i32_0 = arith.constant 0 : i32
    return %arg0, %c0_i32, %arg2 : i32, i32, i32
  }
  func.func @transform_1(%arg0: i32, %arg1: i32, %arg2: i32) -> (i32, i32) {
    %c0_i32 = arith.constant 0 : i32
    %c0_i32_0 = arith.constant 0 : i32
    return %arg1, %c0_i32 : i32, i32
  }
  func.func @transform_2(%arg0: i32, %arg1: i32, %arg2: i32) -> (i32, i32) {
    %c0_i32 = arith.constant 0 : i32
    %c0_i32_0 = arith.constant 0 : i32
    return %arg1, %c0_i32 : i32, i32
  }
  func.func @transform_3(%arg0: i32, %arg1: i32, %arg2: i32) -> (i32, i32, i32) {
    %c0_i32 = arith.constant 0 : i32
    return %arg0, %arg1, %arg2 : i32, i32, i32
  }
}

</mosaic_0001>

<llo_original>
// kernel: tpu_custom_call.1
$region0: #{tpu_custom_call.1}
  #allocation0 [shape = 'u32[]', space=smem, size = 0x4, offset = 0x4, fixed_abs, tag = 'smem constant byte address 0x4 - core index']
  #allocation1 [shape = 'u32[72,128]{1,0:T(1,128)}', space=vmem, size = 0x9000, scoped, tag = 'internal scratch']
  %s0 = inlined_call_operand.vmem [shape: bf16[2,4,256], index: 0, kind: input, shape index: {}]
  %s1 = inlined_call_operand.vmem [shape: bf16[32,4], index: 1, kind: input, shape index: {}]
  %s2 = inlined_call_operand.vmem [shape: f32[32,1], index: 2, kind: input, shape index: {}]
  %s3 = inlined_call_operand.hbm [shape: f32[2,32,256], index: 3, kind: output, shape index: {}]
  %s4 = sld [smem:[#allocation0]]
  $region45: #{tpu_custom_call.1} parent=0
    _
  %s6 = ssub.s32 1, %s4
  %s7 = scalar_select 0, %s6, %s4
  $region1: #{tpu_custom_call.1} parent=0
    #allocation2 [shape = 'u8[65536]{0}', space=vmem, size = 0x10000, scoped, tag = 'output window, operand 0']
    #allocation3 [shape = 's32[2]{0}', space=sflag, size = 0x8, scoped, tag = 'scoped memory for tpu_custom_call.1']
    %8 = vsyncpa [#allocation3], 0
    %s9 = scalar_lea.sflag [#allocation3], 1
    %10 = vsyncpa %s9, 0
    loop: start=0, step=1, limit=4
    $region2: #{tpu_custom_call.1} parent=1 // loop_pre_header
      _
    $region3: #{tpu_custom_call.1} parent=1 // loop_header
      %s12 = sphi 0, %s16
      %p13 = scmp.ge.s32.totalorder %s12, 4
      %s19 = sphi 0, %s38
      %s20 = sphi 0, %s34
      %s21 = sphi 0, %s30
      %s22 = sphi 0, %s19
      %s23 = sphi 0, %s20
      %s24 = sphi 0, %s21
      %s25 = sphi 0, %s22
      %s26 = sphi 0, %s23
      %s27 = sphi 0, %s24
      %s43 = sphi 0, %s45
      %s46 = sphi 0, %s43
      %s47 = sphi 0, %s46
      %s63 = sphi 0, %s47
      %s69 = sphi 0, %s71
      %s72 = sphi 0, %s69
      %s73 = sphi 0, %s72
      %s89 = sphi 0, %s73
      %s95 = sphi 0, %s97
      %s98 = sphi 0, %s95
      %s99 = sphi 0, %s98
      %s115 = sphi 0, %s99
      %s125 = sphi 0, %s127
      %s128 = sphi 0, %s125
      %s129 = sphi 0, %s128
      %s145 = sphi 0, %s129
    $region4: #{tpu_custom_call.1} parent=1 // loop_header_branch
      %15 = sbr.rel (%p13) target = $region8
    $region5: #{tpu_custom_call.1} parent=1 // loop_body
      %s17 = ssub.s32 %s12, 1
      %s18 = ssub.s32 %s12, 2
      %s28 = sadd.s32 1, %s21
      %p29 = scmp.ge.s32.totalorder %s28, 1
      %s30 = scalar_select %p29, 0, %s28
      %s31 = sadd.s32 1, %s20
      %s32 = scalar_select %p29, %s31, %s20
      %p33 = scmp.ge.s32.totalorder %s32, 1
      %s34 = scalar_select %p33, 0, %s32
      %s35 = sadd.s32 1, %s19
      %s36 = scalar_select %p33, %s35, %s19
      %p37 = scmp.ge.s32.totalorder %s36, 2
      %s38 = scalar_select %p37, 0, %s36
      %s39 = ssub.s32 %s19, %s38
      %s40 = ssub.s32 %s21, %s30
      %s41 = sor.u32 %s39, %s40
      %p42 = scmp.eq.s32.totalorder %s41, 0
      %s44 = sadd.s32 %s43, 1
      %s45 = scalar_select %p42, %s43, %s44
      %p48 = pneg %p42
      %p49 = scmp.eq.s32.totalorder %s12, 1
      %p50 = por %p48, %p49
      %p51 = scmp.ne.s32.totalorder %s43, %s46
      %p52 = scmp.eq.s32.totalorder %s12, 0
      %p53 = por %p51, %p52
      %p54 = scmp.ne.s32.totalorder %s43, %s46
      %p55 = scmp.eq.s32.totalorder %s17, 1
      %p56 = por %p54, %p55
      %p57 = scmp.ne.s32.totalorder %s46, %s47
      %p58 = scmp.eq.s32.totalorder %s17, 0
      %p59 = por %p57, %p58
      %p60 = scmp.ne.s32.totalorder %s46, %s47
      %p61 = scmp.eq.s32.totalorder %s18, 1
      %p62 = por %p60, %p61
      %p64 = scmp.ne.s32.totalorder %s47, %s63
      %p65 = scmp.eq.s32.totalorder %s18, 0
      %p66 = por %p64, %p65
      %s67 = ssub.s32 %s20, %s34
      %p68 = scmp.eq.s32.totalorder %s67, 0
      %s70 = sadd.s32 %s69, 1
      %s71 = scalar_select %p68, %s69, %s70
      %p74 = pneg %p68
      %p75 = scmp.eq.s32.totalorder %s12, 1
      %p76 = por %p74, %p75
      %p77 = scmp.ne.s32.totalorder %s69, %s72
      %p78 = scmp.eq.s32.totalorder %s12, 0
      %p79 = por %p77, %p78
      %p80 = scmp.ne.s32.totalorder %s69, %s72
      %p81 = scmp.eq.s32.totalorder %s17, 1
      %p82 = por %p80, %p81
      %p83 = scmp.ne.s32.totalorder %s72, %s73
      %p84 = scmp.eq.s32.totalorder %s17, 0
      %p85 = por %p83, %p84
      %p86 = scmp.ne.s32.totalorder %s72, %s73
      %p87 = scmp.eq.s32.totalorder %s18, 1
      %p88 = por %p86, %p87
      %p90 = scmp.ne.s32.totalorder %s73, %s89
      %p91 = scmp.eq.s32.totalorder %s18, 0
      %p92 = por %p90, %p91
      %s93 = ssub.s32 %s20, %s34
      %p94 = scmp.eq.s32.totalorder %s93, 0
      %s96 = sadd.s32 %s95, 1
      %s97 = scalar_select %p94, %s95, %s96
      %p100 = pneg %p94
      %p101 = scmp.eq.s32.totalorder %s12, 1
      %p102 = por %p100, %p101
      %p103 = scmp.ne.s32.totalorder %s95, %s98
      %p104 = scmp.eq.s32.totalorder %s12, 0
      %p105 = por %p103, %p104
      %p106 = scmp.ne.s32.totalorder %s95, %s98
      %p107 = scmp.eq.s32.totalorder %s17, 1
      %p108 = por %p106, %p107
      %p109 = scmp.ne.s32.totalorder %s98, %s99
      %p110 = scmp.eq.s32.totalorder %s17, 0
      %p111 = por %p109, %p110
      %p112 = scmp.ne.s32.totalorder %s98, %s99
      %p113 = scmp.eq.s32.totalorder %s18, 1
      %p114 = por %p112, %p113
      %p116 = scmp.ne.s32.totalorder %s99, %s115
      %p117 = scmp.eq.s32.totalorder %s18, 0
      %p118 = por %p116, %p117
      %s119 = ssub.s32 %s19, %s38
      %s120 = ssub.s32 %s20, %s34
      %s121 = sor.u32 %s119, %s120
      %s122 = ssub.s32 %s21, %s30
      %s123 = sor.u32 %s121, %s122
      %p124 = scmp.eq.s32.totalorder %s123, 0
      %s126 = sadd.s32 %s125, 1
      %s127 = scalar_select %p124, %s125, %s126
      %p130 = pneg %p124
      %p131 = scmp.eq.s32.totalorder %s12, 1
      %p132 = por %p130, %p131
      %p133 = scmp.ne.s32.totalorder %s125, %s128
      %p134 = scmp.eq.s32.totalorder %s12, 0
      %p135 = por %p133, %p134
      %p136 = scmp.ne.s32.totalorder %s125, %s128
      %p137 = scmp.eq.s32.totalorder %s17, 1
      %p138 = por %p136, %p137
      %p139 = scmp.ne.s32.totalorder %s128, %s129
      %p140 = scmp.eq.s32.totalorder %s17, 0
      %p141 = por %p139, %p140
      %p142 = scmp.ne.s32.totalorder %s128, %s129
      %p143 = scmp.eq.s32.totalorder %s18, 1
      %p144 = por %p142, %p143
      %p146 = scmp.ne.s32.totalorder %s129, %s145
      %p147 = scmp.eq.s32.totalorder %s18, 0
      %p148 = por %p146, %p147
      %p149 = scmp.le.s32.totalorder 1, %s12
      %p150 = scmp.lt.s32.totalorder %s12, 3
      %p151 = pnand %p149, %p150
      %p152 = pneg %p151
      // Predicated region
      $region9: #{tpu_custom_call.1} parent=5 // pred_check
        _
      $region10: #{tpu_custom_call.1} parent=5 // pred_check_branch
        %154 = sbr.rel (%p151) target = $region12
      $region11: #{tpu_custom_call.1} parent=5 // pred_region
        %s155 = ssub.s32 %s12, 1
        // Predicated region
        $region13: #{tpu_custom_call.1} parent=11 // pred_check
          %p156 = pneg %p85
        $region14: #{tpu_custom_call.1} parent=11 // pred_check_branch
          %158 = sbr.rel (%p156) target = $region16
        $region15: #{tpu_custom_call.1} parent=11 // pred_region
          %s159 = smul.u32 4, %s23
          %p160 = scmp.lt.s32.totalorder %s159, 3
          %s161 = scalar_select %p160, %s159, 3
          %s162 = smul.addr %s161, 4
          %s163 = scalar_lea.vmem %s1, %s162
          %s164 = smul.u32 4, %s23
        $region16: #{tpu_custom_call.1} parent=11 // pred_fallthru
          _
        // Predicated region
        $region17: #{tpu_custom_call.1} parent=11 // pred_check
          %p165 = pneg %p111
        $region18: #{tpu_custom_call.1} parent=11 // pred_check_branch
          %167 = sbr.rel (%p165) target = $region20
        $region19: #{tpu_custom_call.1} parent=11 // pred_region
          %s168 = smul.u32 4, %s23
          %p169 = scmp.lt.s32.totalorder %s168, 3
          %s170 = scalar_select %p169, %s168, 3
          %s171 = smul.addr %s170, 8
          %s172 = scalar_lea.vmem %s2, %s171
          %s173 = smul.u32 4, %s23
        $region20: #{tpu_custom_call.1} parent=11 // pred_fallthru
          _
      $region12: #{tpu_custom_call.1} parent=5 // pred_fallthru
        _
      %p174 = scmp.lt.s32.totalorder %s12, 2
      // Predicated region
      $region21: #{tpu_custom_call.1} parent=5 // pred_check
        %p175 = pneg %p174
      $region22: #{tpu_custom_call.1} parent=5 // pred_check_branch
        %177 = sbr.rel (%p175) target = $region24
      $region23: #{tpu_custom_call.1} parent=5 // pred_region
        // Predicated region
        $region25: #{tpu_custom_call.1} parent=23 // pred_check
          %p178 = pneg %p53
        $region26: #{tpu_custom_call.1} parent=23 // pred_check_branch
          %180 = sbr.rel (%p178) target = $region28
        $region27: #{tpu_custom_call.1} parent=23 // pred_region
          %s181 = smul.u32 2, %s21
          %p182 = scmp.lt.s32.totalorder %s19, 1
          %s183 = scalar_select %p182, %s19, 1
          %p184 = scmp.lt.s32.totalorder %s181, 1
          %s185 = scalar_select %p184, %s181, 1
          %s186 = smul.addr %s183, 2
          %s187 = sadd.s32 %s185, %s186
          %s188 = smul.addr %s187, 2
          %s189 = scalar_lea.vmem %s0, %s188
          %s190 = smul.u32 2, %s21
        $region28: #{tpu_custom_call.1} parent=23 // pred_fallthru
          _
      $region24: #{tpu_custom_call.1} parent=5 // pred_fallthru
        _
      %p191 = scmp.le.s32.totalorder 1, %s12
      %p192 = scmp.lt.s32.totalorder %s12, 3
      %p193 = pnand %p191, %p192
      %p194 = pneg %p193
      // Predicated region
      $region29: #{tpu_custom_call.1} parent=5 // pred_check
        _
      $region30: #{tpu_custom_call.1} parent=5 // pred_check_branch
        %196 = sbr.rel (%p193) target = $region32
      $region31: #{tpu_custom_call.1} parent=5 // pred_region
        %s197 = ssub.s32 %s12, 1
        %s198 = smul.u32 2, %s24
        %p199 = scmp.lt.s32.totalorder %s22, 1
        %s200 = scalar_select %p199, %s22, 1
        %p201 = scmp.lt.s32.totalorder %s198, 1
        %s202 = scalar_select %p201, %s198, 1
        %s203 = smul.addr %s200, 2
        %s204 = sadd.s32 %s202, %s203
        %s205 = smul.addr %s204, 2
        %s206 = scalar_lea.vmem %s0, %s205
        %p207 = pneg %p59
        %p208 = pneg %p56
        %s209 = smul.u32 4, %s23
        %p210 = scmp.lt.s32.totalorder %s209, 3
        %s211 = scalar_select %p210, %s209, 3
        %s212 = smul.addr %s211, 4
        %s213 = scalar_lea.vmem %s1, %s212
        %p214 = pneg %p85
        %p215 = pneg %p82
        %s216 = smul.u32 4, %s23
        %p217 = scmp.lt.s32.totalorder %s216, 3
        %s218 = scalar_select %p217, %s216, 3
        %s219 = smul.addr %s218, 8
        %s220 = scalar_lea.vmem %s2, %s219
        %p221 = pneg %p111
        %p222 = pneg %p108
        %p223 = pneg %p141
        %p224 = pneg %p138
        %s225 = sand.u32 %s128, 1
        %s226 = scalar_lea.sflag [#allocation3], %s225
        %s227 = sand.u32 %s128, 1
        %s228 = smul.addr %s227, 64
        %s229 = scalar_lea.vmem [#allocation2], %s228
        %s230 = smul.u32 2, %s24
        %p231 = scmp.lt.s32.totalorder %s22, 1
        %s232 = scalar_select %p231, %s22, 1
        %p233 = scmp.lt.s32.totalorder %s230, 1
        %s234 = scalar_select %p233, %s230, 1
        %s235 = smul.addr %s232, 2
        %s236 = sadd.s32 %s234, %s235
        %s237 = smul.addr %s236, 2
        %s238 = scalar_lea.vmem %s0, %s237
        %s239 = smul.u32 2, %s24
        %s240 = smul.u32 4, %s23
        %p241 = scmp.lt.s32.totalorder %s240, 3
        %s242 = scalar_select %p241, %s240, 3
        %s243 = smul.addr %s242, 4
        %s244 = scalar_lea.vmem %s1, %s243
        %s245 = smul.u32 4, %s23
        %s246 = smul.u32 4, %s23
        %p247 = scmp.lt.s32.totalorder %s246, 3
        %s248 = scalar_select %p247, %s246, 3
        %s249 = smul.addr %s248, 8
        %s250 = scalar_lea.vmem %s2, %s249
        %s251 = smul.u32 4, %s23
        %s252 = smul.u32 4, %s23
        %s253 = smul.u32 2, %s24
        %v255 = vld [vmem:[%s244] sm:$0xf]
        %v256 = vld [vmem:[%s244 + $0x4] sm:$0xf]
        %v257 = vld [vmem:[%s244 + $0x8] sm:$0xf]
        %v258 = vld [vmem:[%s244 + $0xc] sm:$0xf]
        %v259 = vld [vmem:[%s238] sm:$0xf]
        %v260 = vld [vmem:[%s250] sm:$0xff]
        %v261 = vld [vmem:[%s250 + $0x8] sm:$0xff]
        %v262 = vld [vmem:[%s250 + $0x10] sm:$0xff]
        %v263 = vld [vmem:[%s250 + $0x18] sm:$0xff]
        %265 = vset.pattern.permute.xlu0 0
        %266 = vperm.xlu0 %265, %v260
        %v267 = vpop.permute.xlu0 %266
        %270 = vset.pattern.permute.xlu0 0
        %271 = vperm.xlu0 %270, %v261
        %v272 = vpop.permute.xlu0 %271
        %275 = vset.pattern.permute.xlu0 0
        %276 = vperm.xlu0 %275, %v262
        %v277 = vpop.permute.xlu0 %276
        %280 = vset.pattern.permute.xlu0 0
        %281 = vperm.xlu0 %280, %v263
        %v282 = vpop.permute.xlu0 %281
        %v288 = vunpack.c.l.b16 %v255
        %v289 = vunpack.c.l.b16 %v256
        %v290 = vunpack.c.l.b16 %v257
        %v291 = vunpack.c.l.b16 %v258
        %v292 = vpack.c.b16 %v289, %v288
        %v293 = vpack.c.b16 %v291, %v290
        %295 = vst [vmem:[#allocation1] ss:$4 sm:$0xff] %v259
        %v296 = vld.sshfl [vmem:[#allocation1] sm:$0xff pattern:$0x73625140]
        %v297 = vld.sshfl [vmem:[#allocation1 + $0x8] sm:$0xff pattern:$0x73625140]
        %vm298 = vcmask 31744
        %v300 = vsel %vm298, %v292, 0
        %v303 = vsel %vm298, %v293, 0
        %vm305 = vcmask 1041408
        %v306 = vsel %vm305, %v296, 0
        %v308 = vsel %vm305, %v297, 0
        %310 = vmatpush.bf16.msra.mxu0 0
        %311 = vmatpush.bf16.msra.mxu0 0
        %312 = vmatpush.bf16.msra.mxu0 0
        %313 = vmatpush.bf16.msra.mxu0 0
        %314 = vmatpush.bf16.msra.mxu0 0
        %315 = vmatpush.bf16.msra.mxu0 0
        %316 = vmatpush.bf16.msra.mxu0 0
        %317 = vmatpush.bf16.msra.mxu0 %v306
        %318 = vmatmul.bf16.gmra.mxu0 %v300
        %v319 = vpop.f32.mrf.mxu0
        %v320 = vadd.f32 %v267, %v319
        %v321 = vpop.f32.mrf.mxu0
        %v322 = vadd.f32 %v272, %v321
        %323 = vmatmul.bf16.gmra.mxu0 %v303
        %v324 = vpop.f32.mrf.mxu0
        %v325 = vadd.f32 %v277, %v324
        %v326 = vpop.f32.mrf.mxu0
        %v327 = vadd.f32 %v282, %v326
        %328 = vdwg.mxu0
        %329 = vmatpush.bf16.msra.mxu0 0
        %330 = vmatpush.bf16.msra.mxu0 0
        %331 = vmatpush.bf16.msra.mxu0 0
        %332 = vmatpush.bf16.msra.mxu0 0
        %333 = vmatpush.bf16.msra.mxu0 0
        %334 = vmatpush.bf16.msra.mxu0 0
        %335 = vmatpush.bf16.msra.mxu0 0
        %336 = vmatpush.bf16.msra.mxu0 %v308
        %337 = vmatmul.bf16.gmra.mxu0 %v300
        %v338 = vpop.f32.mrf.mxu0
        %v339 = vadd.f32 %v267, %v338
        %v340 = vpop.f32.mrf.mxu0
        %v341 = vadd.f32 %v272, %v340
        %342 = vmatmul.bf16.gmra.mxu0 %v303
        %v343 = vpop.f32.mrf.mxu0
        %v344 = vadd.f32 %v277, %v343
        %v345 = vpop.f32.mrf.mxu0
        %v346 = vadd.f32 %v282, %v345
        %347 = vdwg.mxu0
        %348 = vst [vmem:[%s229] sm:$0xff] %v320
        %349 = vst [vmem:[%s229 + $0x8] sm:$0xff] %v339
        %350 = vst [vmem:[%s229 + $0x10] sm:$0xff] %v322
        %351 = vst [vmem:[%s229 + $0x18] sm:$0xff] %v341
        %352 = vst [vmem:[%s229 + $0x20] sm:$0xff] %v325
        %353 = vst [vmem:[%s229 + $0x28] sm:$0xff] %v344
        %354 = vst [vmem:[%s229 + $0x30] sm:$0xff] %v327
        %355 = vst [vmem:[%s229 + $0x38] sm:$0xff] %v346
        %s356 = sand.u32 %s128, 1
        %s357 = scalar_lea.sflag [#allocation3], %s356
        %s358 = sand.u32 %s128, 1
        %s359 = smul.addr %s358, 64
        %s360 = scalar_lea.vmem [#allocation2], %s359
        // Predicated region
        $region33: #{tpu_custom_call.1} parent=31 // pred_check
          %p361 = pneg %p138
        $region34: #{tpu_custom_call.1} parent=31 // pred_check_branch
          %363 = sbr.rel (%p361) target = $region36
        $region35: #{tpu_custom_call.1} parent=31 // pred_region
          %s364 = smul.u32 4, %s23
          %s365 = smul.u32 2, %s24
          %367 = vsyncadd %s357, 0
          %s368 = smul.addr %s364, 2
          %s369 = sadd.s32 %s365, %s368
          %s370 = smul.addr %s22, 8
          %s371 = sadd.s32 %s369, %s370
          %s372 = smul.addr %s371, 8
          %s373 = scalar_lea.hbm %s3, %s372
          %s374 = sshll.u32 %s360, 4
          %s375 = int_to_ptr.vmem [resolvable:$true] %s374
          %s376 = sshll.u32 %s373, 4
          %s377 = int_to_ptr.hbm [resolvable:$true] %s376
          %382 = dma.vmem_to_hbm [thread:$0]  %s375, 1024, %s377, %s357, 256, 256, 16
        $region36: #{tpu_custom_call.1} parent=31 // pred_fallthru
          _
      $region32: #{tpu_custom_call.1} parent=5 // pred_fallthru
        _
      %p383 = scmp.le.s32.totalorder 2, %s12
      // Predicated region
      $region37: #{tpu_custom_call.1} parent=5 // pred_check
        %p384 = pneg %p383
      $region38: #{tpu_custom_call.1} parent=5 // pred_check_branch
        %386 = sbr.rel (%p384) target = $region40
      $region39: #{tpu_custom_call.1} parent=5 // pred_region
        %s387 = ssub.s32 %s12, 2
        // Predicated region
        $region41: #{tpu_custom_call.1} parent=39 // pred_check
          %p388 = pneg %p144
        $region42: #{tpu_custom_call.1} parent=39 // pred_check_branch
          %390 = sbr.rel (%p388) target = $region44
        $region43: #{tpu_custom_call.1} parent=39 // pred_region
          %s391 = sand.u32 %s129, 1
          %s392 = scalar_lea.sflag [#allocation3], %s391
          %s393 = sand.u32 %s129, 1
          %s394 = smul.addr %s393, 64
          %s395 = scalar_lea.vmem [#allocation2], %s394
          %397 = dma.done %s392, 1024
        $region44: #{tpu_custom_call.1} parent=39 // pred_fallthru
          _
      $region40: #{tpu_custom_call.1} parent=5 // pred_fallthru
        _
    $region6: #{tpu_custom_call.1} parent=1 // loop_footer
      %s16 = sadd.s32 1, %s12
    $region7: #{tpu_custom_call.1} parent=1 // loop_footer_branch
      %11 = sbr.rel target = $region3
    $region8: #{tpu_custom_call.1} parent=1 // loop_exit
      _
    %398 = vsyncpa [#allocation3], 1
    %s399 = scalar_lea.sflag [#allocation3], 1
    %400 = vsyncpa %s399, 1

</llo_original>
